<compile_context>
chip_gen: v6e
topology: v6e:2x2x1
jax: 0.10.0
libtpu: 0.0.40
codegen_flags: <defaults>
</compile_context>

<pallas_src>
import jax
import jax.numpy as jnp
from jax.experimental import pallas as pl
from jax.experimental.pallas import tpu as pltpu

IN_W = 64
KW1, KW2, KW3 = 8, 16, 32
L1, L2, L3 = IN_W - KW1 + 1, IN_W - KW2 + 1, IN_W - KW3 + 1   # 57, 49, 33
HID = 24
PACK = 16            # lane-dense fold: 16*64 = 1024 in-lanes, 16*24 = 384 out-lanes


# ----------------------------------------------------------------------------
# Kernel: one fused affine map per tile:  (tm, K) @ (K, N) + (1, N)
# ----------------------------------------------------------------------------
def affine_kernel(x_ref, w_ref, b_ref, o_ref):
    o_ref[...] = (jnp.dot(x_ref[...], w_ref[...],
                          preferred_element_type=jnp.float32)
                  + b_ref[...]).astype(o_ref.dtype)


# ----------------------------------------------------------------------------
# Helpers
# ----------------------------------------------------------------------------
def _round_up(n, m):
    return (n + m - 1) // m * m


def _pick_tm(rows, row_mult, max_rows, target_steps=8):
    """Rows per tile: aim for >= target_steps grid steps, multiple of row_mult."""
    if rows <= row_mult:
        return rows                       # single full-extent block (always legal)
    t = _round_up(max(pl.cdiv(rows, target_steps), row_mult), row_mult)
    return min(t, max_rows)


def _toeplitz(conv_w, in_w):
    """(in_w, Lout) matrix T with T[j+k, j] = conv_w[k]  (valid 1-D conv)."""
    kw = conv_w.shape[0]
    lout = in_w - kw + 1
    cols = jnp.arange(lout)
    t = jnp.zeros((in_w, lout), jnp.float32)
    for k in range(kw):                   # static loop; trace-time only
        t = t.at[cols + k, cols].set(conv_w[k])
    return t


def init_params(key):
    ks = jax.random.split(key, 12)
    s = 0.1
    return {
        "cw1": jax.random.normal(ks[0], (KW1,), jnp.float32) * s,
        "cw2": jax.random.normal(ks[1], (KW2,), jnp.float32) * s,
        "cw3": jax.random.normal(ks[2], (KW3,), jnp.float32) * s,
        "cb":  jax.random.normal(ks[3], (3,), jnp.float32) * s,        # conv biases
        "w1":  jax.random.normal(ks[4], (L1, HID), jnp.float32) * s,   # Linear1.weight.T
        "b1":  jax.random.normal(ks[5], (HID,), jnp.float32) * s,
        "w2":  jax.random.normal(ks[6], (L2, HID), jnp.float32) * s,
        "b2":  jax.random.normal(ks[7], (HID,), jnp.float32) * s,
        "w3":  jax.random.normal(ks[8], (L3, HID), jnp.float32) * s,
        "b3":  jax.random.normal(ks[9], (HID,), jnp.float32) * s,
        "wf":  jax.random.normal(ks[10], (3 * HID, HID), jnp.float32) * s,  # Linear.weight.T
        "bf":  jax.random.normal(ks[11], (HID,), jnp.float32) * s,
    }


def fold_params(p):
    """Fold convs + branch linears + final linear into one (64,24) affine map."""
    t1 = _toeplitz(p["cw1"], IN_W)
    t2 = _toeplitz(p["cw2"], IN_W)
    t3 = _toeplitz(p["cw3"], IN_W)
    wf1 = p["wf"][0:HID]
    wf2 = p["wf"][HID:2 * HID]
    wf3 = p["wf"][2 * HID:3 * HID]

    w_total = ((t1 @ p["w1"]) @ wf1
               + (t2 @ p["w2"]) @ wf2
               + (t3 @ p["w3"]) @ wf3)                                  # (64, 24)
    # conv bias is broadcast over the conv output width BEFORE the branch
    # Linear -> folds as cb * column-sums(w) + b, then through the final Linear.
    b_total = ((p["cb"][0] * jnp.sum(p["w1"], axis=0) + p["b1"]) @ wf1
               + (p["cb"][1] * jnp.sum(p["w2"], axis=0) + p["b2"]) @ wf2
               + (p["cb"][2] * jnp.sum(p["w3"], axis=0) + p["b3"]) @ wf3
               + p["bf"])                                               # (24,)
    return w_total.astype(jnp.float32), b_total.astype(jnp.float32)


def _run_affine(x2, w, b, out_dtype, tm):
    """pallas_call for out = x2 @ w + b, streaming x2 in (tm, K) tiles."""
    m, kdim = x2.shape
    ndim = w.shape[1]
    grid = (pl.cdiv(m, tm),)                       # ragged last block: Pallas
                                                   # clips the DMA + masks writeback
    xb = x2.dtype.itemsize
    ob = jnp.dtype(out_dtype).itemsize
    cost = pl.CostEstimate(
        flops=2 * grid[0] * tm * kdim * ndim,
        transcendentals=0,
        bytes_accessed=(m * kdim * xb               # x read (no extra pad/cast pass)
                        + m * ndim * ob             # out write (no slicing pass)
                        + w.size * w.dtype.itemsize
                        + b.size * b.dtype.itemsize))

    return pl.pallas_call(
        affine_kernel,
        out_shape=jax.ShapeDtypeStruct((m, ndim), out_dtype),
        grid=grid,
        in_specs=[
            pl.BlockSpec((tm, kdim), lambda i: (i, 0)),     # streamed x tiles
            pl.BlockSpec((kdim, ndim), lambda i: (0, 0)),   # resident weight (const idx)
            pl.BlockSpec((1, ndim), lambda i: (0, 0)),      # resident bias  (const idx)
        ],
        out_specs=pl.BlockSpec((tm, ndim), lambda i: (i, 0)),
        compiler_params=pltpu.CompilerParams(
            dimension_semantics=("parallel",),              # megacore shard on v7x
            vmem_limit_bytes=32 * 1024 * 1024),
        cost_estimate=cost,
    )(x2, w, b)


def multi_cnn_decoder(x, p, *, out_dtype=jnp.float32):
    """x: (B, S, 64) -> (B, S, 24).  Streams x in its incoming dtype."""
    B, S, W = x.shape
    assert W == IN_W
    M = B * S

    w_total, b_total = fold_params(p)          # f32 (64,24), (24,)
    cdtype = x.dtype                           # no wrapper-side cast of x

    if M % PACK == 0:
        # Lane-dense packed path: x (M,64)->(M/16,1024), out (M/16,384),
        # weight = I_16 (x) W_total (block-diagonal, still tiny and resident).
        mp = M // PACK
        xk = x.reshape(mp, PACK * IN_W)                              # index-order merge
        wk = jnp.kron(jnp.eye(PACK, dtype=jnp.float32), w_total).astype(cdtype)
        bk = jnp.tile(b_total, PACK).reshape(1, PACK * HID)          # f32 bias
        tm = _pick_tm(mp, 16, 512)             # 512*1024*4 B = 2 MiB per x buffer
        out = _run_affine(xk, wk, bk, out_dtype, tm)
        return out.reshape(B, S, HID)

    # Fallback (M not a multiple of 16): plain (tm,64)@(64,24) path.
    x2 = x.reshape(M, IN_W)
    tm = _pick_tm(M, 16, 4096)                 # 4096*64*4 B = 1 MiB per x buffer
    out = _run_affine(x2, w_total.astype(cdtype), b_total.reshape(1, HID),
                      out_dtype, tm)
    return out.reshape(B, S, HID)


# ----------------------------------------------------------------------------
# Pure-JAX reference matching the PyTorch forward exactly.
# ----------------------------------------------------------------------------
def reference(x, p):
    def conv1d(xx, w, b):
        kw = w.shape[0]
        lout = xx.shape[-1] - kw + 1
        acc = jnp.zeros(xx.shape[:-1] + (lout,), jnp.float32)
        for k in range(kw):
            acc = acc + xx[..., k:k + lout] * w[k]
        return acc + b

    x = x.astype(jnp.float32)
    x1 = conv1d(x, p["cw1"], p["cb"][0]) @ p["w1"] + p["b1"]
    x2 = conv1d(x, p["cw2"], p["cb"][1]) @ p["w2"] + p["b2"]
    x3 = conv1d(x, p["cw3"], p["cb"][2]) @ p["w3"] + p["b3"]
    cat = jnp.concatenate([x1, x2, x3], axis=-1)
    return cat @ p["wf"] + p["bf"]


if __name__ == "__main__":
    params = init_params(jax.random.PRNGKey(42))

    # --- small shape (B=2, S=8 -> M=16): packed lane-dense path, single block ---
    x = jax.random.normal(jax.random.PRNGKey(0), (2, 8, IN_W), jnp.float32)
    out = jax.block_until_ready(multi_cnn_decoder(x, params))
    ref = reference(x, params)
    assert out.shape == (2, 8, HID)
    assert jnp.allclose(out, ref, atol=1e-4, rtol=1e-4), "f32 small mismatch"

    # --- M not a multiple of 16: fallback path + ragged last block (no padding) ---
    x_odd = jax.random.normal(jax.random.PRNGKey(1), (2, 9, IN_W), jnp.float32)
    out_odd = jax.block_until_ready(multi_cnn_decoder(x_odd, params))
    assert jnp.allclose(out_odd, reference(x_odd, params),
                        atol=1e-4, rtol=1e-4), "f32 ragged mismatch"

    # --- larger shape: multi-step pipelined grid on the packed path ---
    x_big = jax.random.normal(jax.random.PRNGKey(2), (4, 300, IN_W), jnp.float32)
    out_big = jax.block_until_ready(multi_cnn_decoder(x_big, params))
    ref_big = reference(x_big, params)
    assert jnp.allclose(out_big, ref_big, atol=1e-4, rtol=1e-4), "f32 big mismatch"

    # --- genuine bf16 streaming: the INPUT arrives in bf16 (no wrapper cast) ---
    x_bf16 = x_big.astype(jnp.bfloat16)
    out_bf16 = jax.block_until_ready(multi_cnn_decoder(x_bf16, params))
    assert jnp.allclose(out_bf16, ref_big, atol=3e-2, rtol=5e-2), "bf16 mismatch"

    print("KERNEL_OK")
</pallas_src>

<mosaic_0001>
module attributes {stable_mosaic.version = 11 : i64} {
  func.func @affine_kernel(%arg0: i32, %arg1: memref<1x1024xf32, #tpu.memory_space<vmem>>, %arg2: memref<1024x384xf32, #tpu.memory_space<vmem>>, %arg3: memref<1x384xf32, #tpu.memory_space<vmem>>, %arg4: memref<1x384xf32, #tpu.memory_space<vmem>>) attributes {dimension_semantics = [#tpu.dimension_semantics<parallel>], iteration_bounds = array<i64: 1>, scalar_prefetch = 0 : i64, scratch_operands = 0 : i64, tpu.core_type = #tpu.core_type<tc>, window_params = [{transform_indices = @transform_0, window_bounds = array<i64: 1, 1024>}, {pipeline_mode = #tpu.pipeline_mode<synchronous>, transform_indices = @transform_1, window_bounds = array<i64: 1024, 384>}, {pipeline_mode = #tpu.pipeline_mode<synchronous>, transform_indices = @transform_2, window_bounds = array<i64: 1, 384>}, {transform_indices = @transform_3, window_bounds = array<i64: 1, 384>}]} {
    %c0 = arith.constant 0 : index
    %c0_0 = arith.constant 0 : index
    %0 = vector.load %arg1[%c0, %c0_0] : memref<1x1024xf32, #tpu.memory_space<vmem>>, vector<1x1024xf32>
    %c0_1 = arith.constant 0 : index
    %c0_2 = arith.constant 0 : index
    %1 = vector.load %arg2[%c0_1, %c0_2] : memref<1024x384xf32, #tpu.memory_space<vmem>>, vector<1024x384xf32>
    %cst = arith.constant dense<0.000000e+00> : vector<1x384xf32>
    %2 = tpu.matmul %0, %1, %cst {dimension_numbers = #tpu.dot_dimension_numbers<[1], [0], [0], [1], [0, 0, 1, 1], [], []>} : vector<1x1024xf32>, vector<1024x384xf32>, vector<1x384xf32> -> vector<1x384xf32>
    %c0_3 = arith.constant 0 : index
    %c0_4 = arith.constant 0 : index
    %3 = vector.load %arg3[%c0_3, %c0_4] : memref<1x384xf32, #tpu.memory_space<vmem>>, vector<1x384xf32>
    %4 = arith.addf %2, %3 : vector<1x384xf32>
    %c0_5 = arith.constant 0 : index
    %c0_6 = arith.constant 0 : index
    %5 = vector.load %arg4[%c0_5, %c0_6] : memref<1x384xf32, #tpu.memory_space<vmem>>, vector<1x384xf32>
    tpu.vector_store %arg4[%c0_5, %c0_6], %4 {strides = array<i32>} : memref<1x384xf32, #tpu.memory_space<vmem>>, vector<1x384xf32>,
    return
  }
  func.func @transform_0(%arg0: i32) -> (i32, i32) {
    %c0_i32 = arith.constant 0 : i32
    %c0_i32_0 = arith.constant 0 : i32
    return %arg0, %c0_i32 : i32, i32
  }
  func.func @transform_1(%arg0: i32) -> (i32, i32) {
    %c0_i32 = arith.constant 0 : i32
    %c0_i32_0 = arith.constant 0 : i32
    %c0_i32_1 = arith.constant 0 : i32
    return %c0_i32, %c0_i32_0 : i32, i32
  }
  func.func @transform_2(%arg0: i32) -> (i32, i32) {
    %c0_i32 = arith.constant 0 : i32
    %c0_i32_0 = arith.constant 0 : i32
    %c0_i32_1 = arith.constant 0 : i32
    return %c0_i32, %c0_i32_0 : i32, i32
  }
  func.func @transform_3(%arg0: i32) -> (i32, i32) {
    %c0_i32 = arith.constant 0 : i32
    %c0_i32_0 = arith.constant 0 : i32
    return %arg0, %c0_i32 : i32, i32
  }
}

</mosaic_0001>

<llo_original>
// kernel: tpu_custom_call.1
$region0: #{tpu_custom_call.1}
  #allocation0 [shape = 'u32[]', space=smem, size = 0x4, offset = 0x4, fixed_abs, tag = 'smem constant byte address 0x4 - core index']
  #allocation1 [shape = 'u32[144,128]{1,0:T(1,128)}', space=vmem, size = 0x12000, scoped, tag = 'internal scratch']
  %s0 = inlined_call_operand.hbm [shape: f32[1,1024], index: 0, kind: input, shape index: {}]
  %s1 = inlined_call_operand.hbm [shape: f32[1024,384], index: 1, kind: input, shape index: {}]
  %s2 = inlined_call_operand.hbm [shape: f32[1,384], index: 2, kind: input, shape index: {}]
  %s3 = inlined_call_operand.hbm [shape: f32[1,384], index: 3, kind: output, shape index: {}]
  %s4 = sld [smem:[#allocation0]]
  $region34: #{tpu_custom_call.1} parent=0
    _
  %s6 = ssub.s32 1, %s4
  %s7 = scalar_select 0, %s6, %s4
  $region1: #{tpu_custom_call.1} parent=0
    #allocation2 [shape = 'u8[4096]{0}', space=vmem, size = 0x1000, scoped, tag = 'input window, operand 0, single buffered']
    #allocation3 [shape = 's32[1]{0}', space=sflag, size = 0x4, scoped, tag = 'scoped memory for tpu_custom_call.1']
    #allocation4 [shape = 's32[1]{0}', space=sflag, size = 0x4, scoped, tag = 'scoped memory for tpu_custom_call.1']
    #allocation5 [shape = 'u8[1572864]{0}', space=vmem, size = 0x180000, scoped, tag = 'input window, operand 1, single buffered']
    #allocation6 [shape = 's32[1]{0}', space=sflag, size = 0x4, scoped, tag = 'scoped memory for tpu_custom_call.1']
    #allocation7 [shape = 'u8[1536]{0}', space=vmem, size = 0x800, scoped, tag = 'input window, operand 2, single buffered']
    #allocation8 [shape = 'u8[1536]{0}', space=vmem, size = 0x800, scoped, tag = 'output window, operand 0, single buffered']
    %8 = vsyncpa [#allocation3], 0
    %9 = vsyncpa [#allocation6], 0
    %10 = vsyncpa [#allocation4], 0
    // Predicated region
    $region2: #{tpu_custom_call.1} parent=1 // pred_check
      _
    $region3: #{tpu_custom_call.1} parent=1 // pred_check_branch
      %12 = sbr.rel (0) target = $region5
    $region4: #{tpu_custom_call.1} parent=1 // pred_region
      %s14 = ssub.s32 128, 128
      %15 = vsyncadd [#allocation3], %s14
      %s17 = sshll.u32 [#allocation2], 4
      %s18 = int_to_ptr.vmem [resolvable:$true] %s17
      %20 = dma.hbm_to_vmem [thread:$0]  %s0, 128, %s18, [#allocation3]
    $region5: #{tpu_custom_call.1} parent=1 // pred_fallthru
      _
    // Predicated region
    $region6: #{tpu_custom_call.1} parent=1 // pred_check
      _
    $region7: #{tpu_custom_call.1} parent=1 // pred_check_branch
      %22 = sbr.rel (0) target = $region9
    $region8: #{tpu_custom_call.1} parent=1 // pred_region
      %s24 = ssub.s32 49152, 49152
      %25 = vsyncadd [#allocation6], %s24
      %s26 = sshll.u32 [#allocation5], 4
      %s27 = int_to_ptr.vmem [resolvable:$true] %s26
      %32 = dma.hbm_to_vmem [thread:$0]  %s1, 49152, %s27, [#allocation6], 384, 384, 24
    $region9: #{tpu_custom_call.1} parent=1 // pred_fallthru
      _
    // Predicated region
    $region10: #{tpu_custom_call.1} parent=1 // pred_check
      _
    $region11: #{tpu_custom_call.1} parent=1 // pred_check_branch
      %34 = sbr.rel (0) target = $region13
    $region12: #{tpu_custom_call.1} parent=1 // pred_region
      %s36 = ssub.s32 48, 48
      %37 = vsyncadd [#allocation6], %s36
      %s39 = sshll.u32 [#allocation7], 4
      %s40 = int_to_ptr.vmem [resolvable:$true] %s39
      %42 = dma.hbm_to_vmem [thread:$0]  %s2, 48, %s40, [#allocation6]
    $region13: #{tpu_custom_call.1} parent=1 // pred_fallthru
      _
    // Predicated region
    $region14: #{tpu_custom_call.1} parent=1 // pred_check
      _
    $region15: #{tpu_custom_call.1} parent=1 // pred_check_branch
      %44 = sbr.rel (0) target = $region17
    $region16: #{tpu_custom_call.1} parent=1 // pred_region
      %45 = dma.done [#allocation3], 128
    $region17: #{tpu_custom_call.1} parent=1 // pred_fallthru
      _
    // Predicated region
    $region18: #{tpu_custom_call.1} parent=1 // pred_check
      _
    $region19: #{tpu_custom_call.1} parent=1 // pred_check_branch
      %47 = sbr.rel (0) target = $region21
    $region20: #{tpu_custom_call.1} parent=1 // pred_region
      %48 = dma.done [#allocation6], 49152
    $region21: #{tpu_custom_call.1} parent=1 // pred_fallthru
      _
    // Predicated region
    $region22: #{tpu_custom_call.1} parent=1 // pred_check
      _
    $region23: #{tpu_custom_call.1} parent=1 // pred_check_branch
      %50 = sbr.rel (0) target = $region25
    $region24: #{tpu_custom_call.1} parent=1 // pred_region
      %51 = dma.done [#allocation6], 48
    $region25: #{tpu_custom_call.1} parent=1 // pred_fallthru
      _
    %v52 = vld [vmem:[#allocation2] sm:$0xff]
    %v53 = vld [vmem:[#allocation5] sm:$0xff]
    %v54 = vld [vmem:[#allocation5 + $0x8] sm:$0xff]
    %v55 = vld [vmem:[#allocation5 + $0x10] sm:$0xff]
    %v56 = vld [vmem:[#allocation5 + $0x18] sm:$0xff]
    %v57 = vld [vmem:[#allocation5 + $0x20] sm:$0xff]
    %v58 = vld [vmem:[#allocation5 + $0x28] sm:$0xff]
    %v59 = vld [vmem:[#allocation5 + $0x30] sm:$0xff]
    %v60 = vld [vmem:[#allocation5 + $0x38] sm:$0xff]
    %v61 = vld [vmem:[#allocation5 + $0x40] sm:$0xff]
    %v62 = vld [vmem:[#allocation5 + $0x48] sm:$0xff]
    %v63 = vld [vmem:[#allocation5 + $0x50] sm:$0xff]
    %v64 = vld [vmem:[#allocation5 + $0x58] sm:$0xff]
    %v65 = vld [vmem:[#allocation5 + $0x60] sm:$0xff]
    %v66 = vld [vmem:[#allocation5 + $0x68] sm:$0xff]
    %v67 = vld [vmem:[#allocation5 + $0x70] sm:$0xff]
    %v68 = vld [vmem:[#allocation5 + $0x78] sm:$0xff]
    %v69 = vld [vmem:[#allocation5 + $0x80] sm:$0xff]
    %v70 = vld [vmem:[#allocation5 + $0x88] sm:$0xff]
    %v71 = vld [vmem:[#allocation5 + $0x90] sm:$0xff]
    %v72 = vld [vmem:[#allocation5 + $0x98] sm:$0xff]
    %v73 = vld [vmem:[#allocation5 + $0xa0] sm:$0xff]
    %v74 = vld [vmem:[#allocation5 + $0xa8] sm:$0xff]
    %v75 = vld [vmem:[#allocation5 + $0xb0] sm:$0xff]
    %v76 = vld [vmem:[#allocation5 + $0xb8] sm:$0xff]
    %v77 = vld [vmem:[#allocation5 + $0xc0] sm:$0xff]
    %v78 = vld [vmem:[#allocation5 + $0xc8] sm:$0xff]
    %v79 = vld [vmem:[#allocation5 + $0xd0] sm:$0xff]
    %v80 = vld [vmem:[#allocation5 + $0xd8] sm:$0xff]
    %v81 = vld [vmem:[#allocation5 + $0xe0] sm:$0xff]
    %v82 = vld [vmem:[#allocation5 + $0xe8] sm:$0xff]
    %v83 = vld [vmem:[#allocation5 + $0xf0] sm:$0xff]
    %v84 = vld [vmem:[#allocation5 + $0xf8] sm:$0xff]
    %v85 = vld [vmem:[#allocation5 + $0x100] sm:$0xff]
    %v86 = vld [vmem:[#allocation5 + $0x108] sm:$0xff]
    %v87 = vld [vmem:[#allocation5 + $0x110] sm:$0xff]
    %v88 = vld [vmem:[#allocation5 + $0x118] sm:$0xff]
    %v89 = vld [vmem:[#allocation5 + $0x120] sm:$0xff]
    %v90 = vld [vmem:[#allocation5 + $0x128] sm:$0xff]
    %v91 = vld [vmem:[#allocation5 + $0x130] sm:$0xff]
    %v92 = vld [vmem:[#allocation5 + $0x138] sm:$0xff]
    %v93 = vld [vmem:[#allocation5 + $0x140] sm:$0xff]
    %v94 = vld [vmem:[#allocation5 + $0x148] sm:$0xff]
    %v95 = vld [vmem:[#allocation5 + $0x150] sm:$0xff]
    %v96 = vld [vmem:[#allocation5 + $0x158] sm:$0xff]
    %v97 = vld [vmem:[#allocation5 + $0x160] sm:$0xff]
    %v98 = vld [vmem:[#allocation5 + $0x168] sm:$0xff]
    %v99 = vld [vmem:[#allocation5 + $0x170] sm:$0xff]
    %v100 = vld [vmem:[#allocation5 + $0x178] sm:$0xff]
    %v101 = vld [vmem:[#allocation5 + $0x180] sm:$0xff]
    %v102 = vld [vmem:[#allocation5 + $0x188] sm:$0xff]
    %v103 = vld [vmem:[#allocation5 + $0x190] sm:$0xff]
    %v104 = vld [vmem:[#allocation5 + $0x198] sm:$0xff]
    %v105 = vld [vmem:[#allocation5 + $0x1a0] sm:$0xff]
    %v106 = vld [vmem:[#allocation5 + $0x1a8] sm:$0xff]
    %v107 = vld [vmem:[#allocation5 + $0x1b0] sm:$0xff]
    %v108 = vld [vmem:[#allocation5 + $0x1b8] sm:$0xff]
    %v109 = vld [vmem:[#allocation5 + $0x1c0] sm:$0xff]
    %v110 = vld [vmem:[#allocation5 + $0x1c8] sm:$0xff]
    %v111 = vld [vmem:[#allocation5 + $0x1d0] sm:$0xff]
    %v112 = vld [vmem:[#allocation5 + $0x1d8] sm:$0xff]
    %v113 = vld [vmem:[#allocation5 + $0x1e0] sm:$0xff]
    %v114 = vld [vmem:[#allocation5 + $0x1e8] sm:$0xff]
    %v115 = vld [vmem:[#allocation5 + $0x1f0] sm:$0xff]
    %v116 = vld [vmem:[#allocation5 + $0x1f8] sm:$0xff]
    %v117 = vld [vmem:[#allocation5 + $0x200] sm:$0xff]
    %v118 = vld [vmem:[#allocation5 + $0x208] sm:$0xff]
    %v119 = vld [vmem:[#allocation5 + $0x210] sm:$0xff]
    %v120 = vld [vmem:[#allocation5 + $0x218] sm:$0xff]
    %v121 = vld [vmem:[#allocation5 + $0x220] sm:$0xff]
    %v122 = vld [vmem:[#allocation5 + $0x228] sm:$0xff]
    %v123 = vld [vmem:[#allocation5 + $0x230] sm:$0xff]
    %v124 = vld [vmem:[#allocation5 + $0x238] sm:$0xff]
    %v125 = vld [vmem:[#allocation5 + $0x240] sm:$0xff]
    %v126 = vld [vmem:[#allocation5 + $0x248] sm:$0xff]
    %v127 = vld [vmem:[#allocation5 + $0x250] sm:$0xff]
    %v128 = vld [vmem:[#allocation5 + $0x258] sm:$0xff]
    %v129 = vld [vmem:[#allocation5 + $0x260] sm:$0xff]
    %v130 = vld [vmem:[#allocation5 + $0x268] sm:$0xff]
    %v131 = vld [vmem:[#allocation5 + $0x270] sm:$0xff]
    %v132 = vld [vmem:[#allocation5 + $0x278] sm:$0xff]
    %v133 = vld [vmem:[#allocation5 + $0x280] sm:$0xff]
    %v134 = vld [vmem:[#allocation5 + $0x288] sm:$0xff]
    %v135 = vld [vmem:[#allocation5 + $0x290] sm:$0xff]
    %v136 = vld [vmem:[#allocation5 + $0x298] sm:$0xff]
    %v137 = vld [vmem:[#allocation5 + $0x2a0] sm:$0xff]
    %v138 = vld [vmem:[#allocation5 + $0x2a8] sm:$0xff]
    %v139 = vld [vmem:[#allocation5 + $0x2b0] sm:$0xff]
    %v140 = vld [vmem:[#allocation5 + $0x2b8] sm:$0xff]
    %v141 = vld [vmem:[#allocation5 + $0x2c0] sm:$0xff]
    %v142 = vld [vmem:[#allocation5 + $0x2c8] sm:$0xff]
    %v143 = vld [vmem:[#allocation5 + $0x2d0] sm:$0xff]
    %v144 = vld [vmem:[#allocation5 + $0x2d8] sm:$0xff]
    %v145 = vld [vmem:[#allocation5 + $0x2e0] sm:$0xff]
    %v146 = vld [vmem:[#allocation5 + $0x2e8] sm:$0xff]
    %v147 = vld [vmem:[#allocation5 + $0x2f0] sm:$0xff]
    %v148 = vld [vmem:[#allocation5 + $0x2f8] sm:$0xff]
    %v149 = vld [vmem:[#allocation5 + $0x300] sm:$0xff]
    %v150 = vld [vmem:[#allocation5 + $0x308] sm:$0xff]
    %v151 = vld [vmem:[#allocation5 + $0x310] sm:$0xff]
    %v152 = vld [vmem:[#allocation5 + $0x318] sm:$0xff]
    %v153 = vld [vmem:[#allocation5 + $0x320] sm:$0xff]
    %v154 = vld [vmem:[#allocation5 + $0x328] sm:$0xff]
    %v155 = vld [vmem:[#allocation5 + $0x330] sm:$0xff]
    %v156 = vld [vmem:[#allocation5 + $0x338] sm:$0xff]
    %v157 = vld [vmem:[#allocation5 + $0x340] sm:$0xff]
    %v158 = vld [vmem:[#allocation5 + $0x348] sm:$0xff]
    %v159 = vld [vmem:[#allocation5 + $0x350] sm:$0xff]
    %v160 = vld [vmem:[#allocation5 + $0x358] sm:$0xff]
    %v161 = vld [vmem:[#allocation5 + $0x360] sm:$0xff]
    %v162 = vld [vmem:[#allocation5 + $0x368] sm:$0xff]
    %v163 = vld [vmem:[#allocation5 + $0x370] sm:$0xff]
    %v164 = vld [vmem:[#allocation5 + $0x378] sm:$0xff]
    %v165 = vld [vmem:[#allocation5 + $0x380] sm:$0xff]
    %v166 = vld [vmem:[#allocation5 + $0x388] sm:$0xff]
    %v167 = vld [vmem:[#allocation5 + $0x390] sm:$0xff]
    %v168 = vld [vmem:[#allocation5 + $0x398] sm:$0xff]
    %v169 = vld [vmem:[#allocation5 + $0x3a0] sm:$0xff]
    %v170 = vld [vmem:[#allocation5 + $0x3a8] sm:$0xff]
    %v171 = vld [vmem:[#allocation5 + $0x3b0] sm:$0xff]
    %v172 = vld [vmem:[#allocation5 + $0x3b8] sm:$0xff]
    %v173 = vld [vmem:[#allocation5 + $0x3c0] sm:$0xff]
    %v174 = vld [vmem:[#allocation5 + $0x3c8] sm:$0xff]
    %v175 = vld [vmem:[#allocation5 + $0x3d0] sm:$0xff]
    %v176 = vld [vmem:[#allocation5 + $0x3d8] sm:$0xff]
    %v177 = vld [vmem:[#allocation5 + $0x3e0] sm:$0xff]
    %v178 = vld [vmem:[#allocation5 + $0x3e8] sm:$0xff]
    %v179 = vld [vmem:[#allocation5 + $0x3f0] sm:$0xff]
    %v180 = vld [vmem:[#allocation5 + $0x3f8] sm:$0xff]
    %v181 = vld [vmem:[#allocation5 + $0x400] sm:$0xff]
    %v182 = vld [vmem:[#allocation5 + $0x408] sm:$0xff]
    %v183 = vld [vmem:[#allocation5 + $0x410] sm:$0xff]
    %v184 = vld [vmem:[#allocation5 + $0x418] sm:$0xff]
    %v185 = vld [vmem:[#allocation5 + $0x420] sm:$0xff]
    %v186 = vld [vmem:[#allocation5 + $0x428] sm:$0xff]
    %v187 = vld [vmem:[#allocation5 + $0x430] sm:$0xff]
    %v188 = vld [vmem:[#allocation5 + $0x438] sm:$0xff]
    %v189 = vld [vmem:[#allocation5 + $0x440] sm:$0xff]
    %v190 = vld [vmem:[#allocation5 + $0x448] sm:$0xff]
    %v191 = vld [vmem:[#allocation5 + $0x450] sm:$0xff]
    %v192 = vld [vmem:[#allocation5 + $0x458] sm:$0xff]
    %v193 = vld [vmem:[#allocation5 + $0x460] sm:$0xff]
    %v194 = vld [vmem:[#allocation5 + $0x468] sm:$0xff]
    %v195 = vld [vmem:[#allocation5 + $0x470] sm:$0xff]
    %v196 = vld [vmem:[#allocation5 + $0x478] sm:$0xff]
    %v197 = vld [vmem:[#allocation5 + $0x480] sm:$0xff]
    %v198 = vld [vmem:[#allocation5 + $0x488] sm:$0xff]
    %v199 = vld [vmem:[#allocation5 + $0x490] sm:$0xff]
    %v200 = vld [vmem:[#allocation5 + $0x498] sm:$0xff]
    %v201 = vld [vmem:[#allocation5 + $0x4a0] sm:$0xff]
    %v202 = vld [vmem:[#allocation5 + $0x4a8] sm:$0xff]
    %v203 = vld [vmem:[#allocation5 + $0x4b0] sm:$0xff]
    %v204 = vld [vmem:[#allocation5 + $0x4b8] sm:$0xff]
    %v205 = vld [vmem:[#allocation5 + $0x4c0] sm:$0xff]
    %v206 = vld [vmem:[#allocation5 + $0x4c8] sm:$0xff]
    %v207 = vld [vmem:[#allocation5 + $0x4d0] sm:$0xff]
    %v208 = vld [vmem:[#allocation5 + $0x4d8] sm:$0xff]
    %v209 = vld [vmem:[#allocation5 + $0x4e0] sm:$0xff]
    %v210 = vld [vmem:[#allocation5 + $0x4e8] sm:$0xff]
    %v211 = vld [vmem:[#allocation5 + $0x4f0] sm:$0xff]
    %v212 = vld [vmem:[#allocation5 + $0x4f8] sm:$0xff]
    %v213 = vld [vmem:[#allocation5 + $0x500] sm:$0xff]
    %v214 = vld [vmem:[#allocation5 + $0x508] sm:$0xff]
    %v215 = vld [vmem:[#allocation5 + $0x510] sm:$0xff]
    %v216 = vld [vmem:[#allocation5 + $0x518] sm:$0xff]
    %v217 = vld [vmem:[#allocation5 + $0x520] sm:$0xff]
    %v218 = vld [vmem:[#allocation5 + $0x528] sm:$0xff]
    %v219 = vld [vmem:[#allocation5 + $0x530] sm:$0xff]
    %v220 = vld [vmem:[#allocation5 + $0x538] sm:$0xff]
    %v221 = vld [vmem:[#allocation5 + $0x540] sm:$0xff]
    %v222 = vld [vmem:[#allocation5 + $0x548] sm:$0xff]
    %v223 = vld [vmem:[#allocation5 + $0x550] sm:$0xff]
    %v224 = vld [vmem:[#allocation5 + $0x558] sm:$0xff]
    %v225 = vld [vmem:[#allocation5 + $0x560] sm:$0xff]
    %v226 = vld [vmem:[#allocation5 + $0x568] sm:$0xff]
    %v227 = vld [vmem:[#allocation5 + $0x570] sm:$0xff]
    %v228 = vld [vmem:[#allocation5 + $0x578] sm:$0xff]
    %v229 = vld [vmem:[#allocation5 + $0x580] sm:$0xff]
    %v230 = vld [vmem:[#allocation5 + $0x588] sm:$0xff]
    %v231 = vld [vmem:[#allocation5 + $0x590] sm:$0xff]
    %v232 = vld [vmem:[#allocation5 + $0x598] sm:$0xff]
    %v233 = vld [vmem:[#allocation5 + $0x5a0] sm:$0xff]
    %v234 = vld [vmem:[#allocation5 + $0x5a8] sm:$0xff]
    %v235 = vld [vmem:[#allocation5 + $0x5b0] sm:$0xff]
    %v236 = vld [vmem:[#allocation5 + $0x5b8] sm:$0xff]
    %v237 = vld [vmem:[#allocation5 + $0x5c0] sm:$0xff]
    %v238 = vld [vmem:[#allocation5 + $0x5c8] sm:$0xff]
    %v239 = vld [vmem:[#allocation5 + $0x5d0] sm:$0xff]
    %v240 = vld [vmem:[#allocation5 + $0x5d8] sm:$0xff]
    %v241 = vld [vmem:[#allocation5 + $0x5e0] sm:$0xff]
    %v242 = vld [vmem:[#allocation5 + $0x5e8] sm:$0xff]
    %v243 = vld [vmem:[#allocation5 + $0x5f0] sm:$0xff]
    %v244 = vld [vmem:[#allocation5 + $0x5f8] sm:$0xff]
    %v245 = vld [vmem:[#allocation5 + $0x600] sm:$0xff]
    %v246 = vld [vmem:[#allocation5 + $0x608] sm:$0xff]
    %v247 = vld [vmem:[#allocation5 + $0x610] sm:$0xff]
    %v248 = vld [vmem:[#allocation5 + $0x618] sm:$0xff]
    %v249 = vld [vmem:[#allocation5 + $0x620] sm:$0xff]
    %v250 = vld [vmem:[#allocation5 + $0x628] sm:$0xff]
    %v251 = vld [vmem:[#allocation5 + $0x630] sm:$0xff]
    %v252 = vld [vmem:[#allocation5 + $0x638] sm:$0xff]
    %v253 = vld [vmem:[#allocation5 + $0x640] sm:$0xff]
    %v254 = vld [vmem:[#allocation5 + $0x648] sm:$0xff]
    %v255 = vld [vmem:[#allocation5 + $0x650] sm:$0xff]
    %v256 = vld [vmem:[#allocation5 + $0x658] sm:$0xff]
    %v257 = vld [vmem:[#allocation5 + $0x660] sm:$0xff]
    %v258 = vld [vmem:[#allocation5 + $0x668] sm:$0xff]
    %v259 = vld [vmem:[#allocation5 + $0x670] sm:$0xff]
    %v260 = vld [vmem:[#allocation5 + $0x678] sm:$0xff]
    %v261 = vld [vmem:[#allocation5 + $0x680] sm:$0xff]
    %v262 = vld [vmem:[#allocation5 + $0x688] sm:$0xff]
    %v263 = vld [vmem:[#allocation5 + $0x690] sm:$0xff]
    %v264 = vld [vmem:[#allocation5 + $0x698] sm:$0xff]
    %v265 = vld [vmem:[#allocation5 + $0x6a0] sm:$0xff]
    %v266 = vld [vmem:[#allocation5 + $0x6a8] sm:$0xff]
    %v267 = vld [vmem:[#allocation5 + $0x6b0] sm:$0xff]
    %v268 = vld [vmem:[#allocation5 + $0x6b8] sm:$0xff]
    %v269 = vld [vmem:[#allocation5 + $0x6c0] sm:$0xff]
    %v270 = vld [vmem:[#allocation5 + $0x6c8] sm:$0xff]
    %v271 = vld [vmem:[#allocation5 + $0x6d0] sm:$0xff]
    %v272 = vld [vmem:[#allocation5 + $0x6d8] sm:$0xff]
    %v273 = vld [vmem:[#allocation5 + $0x6e0] sm:$0xff]
    %v274 = vld [vmem:[#allocation5 + $0x6e8] sm:$0xff]
    %v275 = vld [vmem:[#allocation5 + $0x6f0] sm:$0xff]
    %v276 = vld [vmem:[#allocation5 + $0x6f8] sm:$0xff]
    %v277 = vld [vmem:[#allocation5 + $0x700] sm:$0xff]
    %v278 = vld [vmem:[#allocation5 + $0x708] sm:$0xff]
    %v279 = vld [vmem:[#allocation5 + $0x710] sm:$0xff]
    %v280 = vld [vmem:[#allocation5 + $0x718] sm:$0xff]
    %v281 = vld [vmem:[#allocation5 + $0x720] sm:$0xff]
    %v282 = vld [vmem:[#allocation5 + $0x728] sm:$0xff]
    %v283 = vld [vmem:[#allocation5 + $0x730] sm:$0xff]
    %v284 = vld [vmem:[#allocation5 + $0x738] sm:$0xff]
    %v285 = vld [vmem:[#allocation5 + $0x740] sm:$0xff]
    %v286 = vld [vmem:[#allocation5 + $0x748] sm:$0xff]
    %v287 = vld [vmem:[#allocation5 + $0x750] sm:$0xff]
    %v288 = vld [vmem:[#allocation5 + $0x758] sm:$0xff]
    %v289 = vld [vmem:[#allocation5 + $0x760] sm:$0xff]
    %v290 = vld [vmem:[#allocation5 + $0x768] sm:$0xff]
    %v291 = vld [vmem:[#allocation5 + $0x770] sm:$0xff]
    %v292 = vld [vmem:[#allocation5 + $0x778] sm:$0xff]
    %v293 = vld [vmem:[#allocation5 + $0x780] sm:$0xff]
    %v294 = vld [vmem:[#allocation5 + $0x788] sm:$0xff]
    %v295 = vld [vmem:[#allocation5 + $0x790] sm:$0xff]
    %v296 = vld [vmem:[#allocation5 + $0x798] sm:$0xff]
    %v297 = vld [vmem:[#allocation5 + $0x7a0] sm:$0xff]
    %v298 = vld [vmem:[#allocation5 + $0x7a8] sm:$0xff]
    %v299 = vld [vmem:[#allocation5 + $0x7b0] sm:$0xff]
    %v300 = vld [vmem:[#allocation5 + $0x7b8] sm:$0xff]
    %v301 = vld [vmem:[#allocation5 + $0x7c0] sm:$0xff]
    %v302 = vld [vmem:[#allocation5 + $0x7c8] sm:$0xff]
    %v303 = vld [vmem:[#allocation5 + $0x7d0] sm:$0xff]
    %v304 = vld [vmem:[#allocation5 + $0x7d8] sm:$0xff]
    %v305 = vld [vmem:[#allocation5 + $0x7e0] sm:$0xff]
    %v306 = vld [vmem:[#allocation5 + $0x7e8] sm:$0xff]
    %v307 = vld [vmem:[#allocation5 + $0x7f0] sm:$0xff]
    %v308 = vld [vmem:[#allocation5 + $0x7f8] sm:$0xff]
    %v309 = vld [vmem:[#allocation5 + $0x800] sm:$0xff]
    %v310 = vld [vmem:[#allocation5 + $0x808] sm:$0xff]
    %v311 = vld [vmem:[#allocation5 + $0x810] sm:$0xff]
    %v312 = vld [vmem:[#allocation5 + $0x818] sm:$0xff]
    %v313 = vld [vmem:[#allocation5 + $0x820] sm:$0xff]
    %v314 = vld [vmem:[#allocation5 + $0x828] sm:$0xff]
    %v315 = vld [vmem:[#allocation5 + $0x830] sm:$0xff]
    %v316 = vld [vmem:[#allocation5 + $0x838] sm:$0xff]
    %v317 = vld [vmem:[#allocation5 + $0x840] sm:$0xff]
    %v318 = vld [vmem:[#allocation5 + $0x848] sm:$0xff]
    %v319 = vld [vmem:[#allocation5 + $0x850] sm:$0xff]
    %v320 = vld [vmem:[#allocation5 + $0x858] sm:$0xff]
    %v321 = vld [vmem:[#allocation5 + $0x860] sm:$0xff]
    %v322 = vld [vmem:[#allocation5 + $0x868] sm:$0xff]
    %v323 = vld [vmem:[#allocation5 + $0x870] sm:$0xff]
    %v324 = vld [vmem:[#allocation5 + $0x878] sm:$0xff]
    %v325 = vld [vmem:[#allocation5 + $0x880] sm:$0xff]
    %v326 = vld [vmem:[#allocation5 + $0x888] sm:$0xff]
    %v327 = vld [vmem:[#allocation5 + $0x890] sm:$0xff]
    %v328 = vld [vmem:[#allocation5 + $0x898] sm:$0xff]
    %v329 = vld [vmem:[#allocation5 + $0x8a0] sm:$0xff]
    %v330 = vld [vmem:[#allocation5 + $0x8a8] sm:$0xff]
    %v331 = vld [vmem:[#allocation5 + $0x8b0] sm:$0xff]
    %v332 = vld [vmem:[#allocation5 + $0x8b8] sm:$0xff]
    %v333 = vld [vmem:[#allocation5 + $0x8c0] sm:$0xff]
    %v334 = vld [vmem:[#allocation5 + $0x8c8] sm:$0xff]
    %v335 = vld [vmem:[#allocation5 + $0x8d0] sm:$0xff]
    %v336 = vld [vmem:[#allocation5 + $0x8d8] sm:$0xff]
    %v337 = vld [vmem:[#allocation5 + $0x8e0] sm:$0xff]
    %v338 = vld [vmem:[#allocation5 + $0x8e8] sm:$0xff]
    %v339 = vld [vmem:[#allocation5 + $0x8f0] sm:$0xff]
    %v340 = vld [vmem:[#allocation5 + $0x8f8] sm:$0xff]
    %v341 = vld [vmem:[#allocation5 + $0x900] sm:$0xff]
    %v342 = vld [vmem:[#allocation5 + $0x908] sm:$0xff]
    %v343 = vld [vmem:[#allocation5 + $0x910] sm:$0xff]
    %v344 = vld [vmem:[#allocation5 + $0x918] sm:$0xff]
    %v345 = vld [vmem:[#allocation5 + $0x920] sm:$0xff]
    %v346 = vld [vmem:[#allocation5 + $0x928] sm:$0xff]
    %v347 = vld [vmem:[#allocation5 + $0x930] sm:$0xff]
    %v348 = vld [vmem:[#allocation5 + $0x938] sm:$0xff]
    %v349 = vld [vmem:[#allocation5 + $0x940] sm:$0xff]
    %v350 = vld [vmem:[#allocation5 + $0x948] sm:$0xff]
    %v351 = vld [vmem:[#allocation5 + $0x950] sm:$0xff]
    %v352 = vld [vmem:[#allocation5 + $0x958] sm:$0xff]
    %v353 = vld [vmem:[#allocation5 + $0x960] sm:$0xff]
    %v354 = vld [vmem:[#allocation5 + $0x968] sm:$0xff]
    %v355 = vld [vmem:[#allocation5 + $0x970] sm:$0xff]
    %v356 = vld [vmem:[#allocation5 + $0x978] sm:$0xff]
    %v357 = vld [vmem:[#allocation5 + $0x980] sm:$0xff]
    %v358 = vld [vmem:[#allocation5 + $0x988] sm:$0xff]
    %v359 = vld [vmem:[#allocation5 + $0x990] sm:$0xff]
    %v360 = vld [vmem:[#allocation5 + $0x998] sm:$0xff]
    %v361 = vld [vmem:[#allocation5 + $0x9a0] sm:$0xff]
    %v362 = vld [vmem:[#allocation5 + $0x9a8] sm:$0xff]
    %v363 = vld [vmem:[#allocation5 + $0x9b0] sm:$0xff]
    %v364 = vld [vmem:[#allocation5 + $0x9b8] sm:$0xff]
    %v365 = vld [vmem:[#allocation5 + $0x9c0] sm:$0xff]
    %v366 = vld [vmem:[#allocation5 + $0x9c8] sm:$0xff]
    %v367 = vld [vmem:[#allocation5 + $0x9d0] sm:$0xff]
    %v368 = vld [vmem:[#allocation5 + $0x9d8] sm:$0xff]
    %v369 = vld [vmem:[#allocation5 + $0x9e0] sm:$0xff]
    %v370 = vld [vmem:[#allocation5 + $0x9e8] sm:$0xff]
    %v371 = vld [vmem:[#allocation5 + $0x9f0] sm:$0xff]
    %v372 = vld [vmem:[#allocation5 + $0x9f8] sm:$0xff]
    %v373 = vld [vmem:[#allocation5 + $0xa00] sm:$0xff]
    %v374 = vld [vmem:[#allocation5 + $0xa08] sm:$0xff]
    %v375 = vld [vmem:[#allocation5 + $0xa10] sm:$0xff]
    %v376 = vld [vmem:[#allocation5 + $0xa18] sm:$0xff]
    %v377 = vld [vmem:[#allocation5 + $0xa20] sm:$0xff]
    %v378 = vld [vmem:[#allocation5 + $0xa28] sm:$0xff]
    %v379 = vld [vmem:[#allocation5 + $0xa30] sm:$0xff]
    %v380 = vld [vmem:[#allocation5 + $0xa38] sm:$0xff]
    %v381 = vld [vmem:[#allocation5 + $0xa40] sm:$0xff]
    %v382 = vld [vmem:[#allocation5 + $0xa48] sm:$0xff]
    %v383 = vld [vmem:[#allocation5 + $0xa50] sm:$0xff]
    %v384 = vld [vmem:[#allocation5 + $0xa58] sm:$0xff]
    %v385 = vld [vmem:[#allocation5 + $0xa60] sm:$0xff]
    %v386 = vld [vmem:[#allocation5 + $0xa68] sm:$0xff]
    %v387 = vld [vmem:[#allocation5 + $0xa70] sm:$0xff]
    %v388 = vld [vmem:[#allocation5 + $0xa78] sm:$0xff]
    %v389 = vld [vmem:[#allocation5 + $0xa80] sm:$0xff]
    %v390 = vld [vmem:[#allocation5 + $0xa88] sm:$0xff]
    %v391 = vld [vmem:[#allocation5 + $0xa90] sm:$0xff]
    %v392 = vld [vmem:[#allocation5 + $0xa98] sm:$0xff]
    %v393 = vld [vmem:[#allocation5 + $0xaa0] sm:$0xff]
    %v394 = vld [vmem:[#allocation5 + $0xaa8] sm:$0xff]
    %v395 = vld [vmem:[#allocation5 + $0xab0] sm:$0xff]
    %v396 = vld [vmem:[#allocation5 + $0xab8] sm:$0xff]
    %v397 = vld [vmem:[#allocation5 + $0xac0] sm:$0xff]
    %v398 = vld [vmem:[#allocation5 + $0xac8] sm:$0xff]
    %v399 = vld [vmem:[#allocation5 + $0xad0] sm:$0xff]
    %v400 = vld [vmem:[#allocation5 + $0xad8] sm:$0xff]
    %v401 = vld [vmem:[#allocation5 + $0xae0] sm:$0xff]
    %v402 = vld [vmem:[#allocation5 + $0xae8] sm:$0xff]
    %v403 = vld [vmem:[#allocation5 + $0xaf0] sm:$0xff]
    %v404 = vld [vmem:[#allocation5 + $0xaf8] sm:$0xff]
    %v405 = vld [vmem:[#allocation5 + $0xb00] sm:$0xff]
    %v406 = vld [vmem:[#allocation5 + $0xb08] sm:$0xff]
    %v407 = vld [vmem:[#allocation5 + $0xb10] sm:$0xff]
    %v408 = vld [vmem:[#allocation5 + $0xb18] sm:$0xff]
    %v409 = vld [vmem:[#allocation5 + $0xb20] sm:$0xff]
    %v410 = vld [vmem:[#allocation5 + $0xb28] sm:$0xff]
    %v411 = vld [vmem:[#allocation5 + $0xb30] sm:$0xff]
    %v412 = vld [vmem:[#allocation5 + $0xb38] sm:$0xff]
    %v413 = vld [vmem:[#allocation5 + $0xb40] sm:$0xff]
    %v414 = vld [vmem:[#allocation5 + $0xb48] sm:$0xff]
    %v415 = vld [vmem:[#allocation5 + $0xb50] sm:$0xff]
    %v416 = vld [vmem:[#allocation5 + $0xb58] sm:$0xff]
    %v417 = vld [vmem:[#allocation5 + $0xb60] sm:$0xff]
    %v418 = vld [vmem:[#allocation5 + $0xb68] sm:$0xff]
    %v419 = vld [vmem:[#allocation5 + $0xb70] sm:$0xff]
    %v420 = vld [vmem:[#allocation5 + $0xb78] sm:$0xff]
    %v421 = vld [vmem:[#allocation5 + $0xb80] sm:$0xff]
    %v422 = vld [vmem:[#allocation5 + $0xb88] sm:$0xff]
    %v423 = vld [vmem:[#allocation5 + $0xb90] sm:$0xff]
    %v424 = vld [vmem:[#allocation5 + $0xb98] sm:$0xff]
    %v425 = vld [vmem:[#allocation5 + $0xba0] sm:$0xff]
    %v426 = vld [vmem:[#allocation5 + $0xba8] sm:$0xff]
    %v427 = vld [vmem:[#allocation5 + $0xbb0] sm:$0xff]
    %v428 = vld [vmem:[#allocation5 + $0xbb8] sm:$0xff]
    %v429 = vld [vmem:[#allocation5 + $0xbc0] sm:$0xff]
    %v430 = vld [vmem:[#allocation5 + $0xbc8] sm:$0xff]
    %v431 = vld [vmem:[#allocation5 + $0xbd0] sm:$0xff]
    %v432 = vld [vmem:[#allocation5 + $0xbd8] sm:$0xff]
    %v433 = vld [vmem:[#allocation5 + $0xbe0] sm:$0xff]
    %v434 = vld [vmem:[#allocation5 + $0xbe8] sm:$0xff]
    %v435 = vld [vmem:[#allocation5 + $0xbf0] sm:$0xff]
    %v436 = vld [vmem:[#allocation5 + $0xbf8] sm:$0xff]
    %v437 = vld [vmem:[#allocation7] sm:$0x7]
    %v439 = vlaneseq
    %v440 = vshrl.u32 %v439, 7
    %v441 = vsub.s32 0, %v440
    %v442 = vrot.slane %v52, %v441
    %v443 = vlaneseq
    %v444 = vshrl.u32 %v443, 7
    %v445 = vsub.s32 1, %v444
    %v446 = vrot.slane %v52, %v445
    %v447 = vlaneseq
    %v448 = vshrl.u32 %v447, 7
    %v449 = vsub.s32 2, %v448
    %v450 = vrot.slane %v52, %v449
    %v451 = vlaneseq
    %v452 = vshrl.u32 %v451, 7
    %v453 = vsub.s32 3, %v452
    %v454 = vrot.slane %v52, %v453
    %v455 = vlaneseq
    %v456 = vshrl.u32 %v455, 7
    %v457 = vsub.s32 4, %v456
    %v458 = vrot.slane %v52, %v457
    %v459 = vlaneseq
    %v460 = vshrl.u32 %v459, 7
    %v461 = vsub.s32 5, %v460
    %v462 = vrot.slane %v52, %v461
    %v463 = vlaneseq
    %v464 = vshrl.u32 %v463, 7
    %v465 = vsub.s32 6, %v464
    %v466 = vrot.slane %v52, %v465
    %v467 = vlaneseq
    %v468 = vshrl.u32 %v467, 7
    %v469 = vsub.s32 7, %v468
    %v470 = vrot.slane %v52, %v469
    %v480 = vlaneseq
    %v481 = vshrl.u32 %v480, 7
    %v482 = vsub.s32 0, %v481
    %v483 = vrot.slane %v437, %v482
    %v484 = vlaneseq
    %v485 = vshrl.u32 %v484, 7
    %v486 = vsub.s32 1, %v485
    %v487 = vrot.slane %v437, %v486
    %v488 = vlaneseq
    %v489 = vshrl.u32 %v488, 7
    %v490 = vsub.s32 2, %v489
    %v491 = vrot.slane %v437, %v490
    %495 = vmatprep.subr.mxu0 %v99
    %496 = vmatpush1.msra.mxu0 %v98
    %497 = vmatprep.subr.mxu0 %v96
    %498 = vmatpush1.msra.mxu0 %v95
    %499 = vmatprep.subr.mxu0 %v93
    %500 = vmatpush1.msra.mxu0 %v92
    %501 = vmatprep.subr.mxu0 %v90
    %502 = vmatpush1.msra.mxu0 %v89
    %503 = vmatprep.subr.mxu0 %v87
    %504 = vmatpush1.msra.mxu0 %v86
    %505 = vmatprep.subr.mxu0 %v84
    %506 = vmatpush1.msra.mxu0 %v83
    %507 = vmatprep.subr.mxu0 %v81
    %508 = vmatpush1.msra.mxu0 %v80
    %509 = vmatprep.subr.mxu0 %v78
    %510 = vmatpush1.msra.mxu0 %v77
    %511 = vmatprep.subr.mxu0 %v75
    %512 = vmatpush1.msra.mxu0 %v74
    %513 = vmatprep.subr.mxu0 %v72
    %514 = vmatpush1.msra.mxu0 %v71
    %515 = vmatprep.subr.mxu0 %v69
    %516 = vmatpush1.msra.mxu0 %v68
    %517 = vmatprep.subr.mxu0 %v66
    %518 = vmatpush1.msra.mxu0 %v65
    %519 = vmatprep.subr.mxu0 %v63
    %520 = vmatpush1.msra.mxu0 %v62
    %521 = vmatprep.subr.mxu0 %v60
    %522 = vmatpush1.msra.mxu0 %v59
    %523 = vmatprep.subr.mxu0 %v57
    %524 = vmatpush1.msra.mxu0 %v56
    %525 = vmatprep.subr.mxu0 %v54
    %526 = vmatpush1.msra.mxu0 %v53
    %527 = vmatprep.subr.mxu0 %v147
    %528 = vmatpush2.msra.mxu0 %v146
    %529 = vmatprep.subr.mxu0 %v144
    %530 = vmatpush2.msra.mxu0 %v143
    %531 = vmatprep.subr.mxu0 %v141
    %532 = vmatpush2.msra.mxu0 %v140
    %533 = vmatprep.subr.mxu0 %v138
    %534 = vmatpush2.msra.mxu0 %v137
    %535 = vmatprep.subr.mxu0 %v135
    %536 = vmatpush2.msra.mxu0 %v134
    %537 = vmatprep.subr.mxu0 %v132
    %538 = vmatpush2.msra.mxu0 %v131
    %539 = vmatprep.subr.mxu0 %v129
    %540 = vmatpush2.msra.mxu0 %v128
    %541 = vmatprep.subr.mxu0 %v126
    %542 = vmatpush2.msra.mxu0 %v125
    %543 = vmatprep.subr.mxu0 %v123
    %544 = vmatpush2.msra.mxu0 %v122
    %545 = vmatprep.subr.mxu0 %v120
    %546 = vmatpush2.msra.mxu0 %v119
    %547 = vmatprep.subr.mxu0 %v117
    %548 = vmatpush2.msra.mxu0 %v116
    %549 = vmatprep.subr.mxu0 %v114
    %550 = vmatpush2.msra.mxu0 %v113
    %551 = vmatprep.subr.mxu0 %v111
    %552 = vmatpush2.msra.mxu0 %v110
    %553 = vmatprep.subr.mxu0 %v108
    %554 = vmatpush2.msra.mxu0 %v107
    %555 = vmatprep.subr.mxu0 %v105
    %556 = vmatpush2.msra.mxu0 %v104
    %557 = vmatprep.subr.mxu0 %v102
    %558 = vmatpush2.msra.mxu0 %v101
    %559 = vmatprep.mubr.f32.mxu0 %v446
    %560 = vmatmul.mubr.f32.gmra.mxu0 %v442
    %v561 = vpop.f32.mrf.mxu0
    %v562 = vadd.f32 %v483, %v561
    %v563 = vpop.f32.mrf.mxu0
    %v564 = vadd.f32 %v487, %v563
    %565 = vdwg.mxu0
    %566 = vmatprep.subr.mxu0 %v195
    %567 = vmatpush1.msra.mxu0 %v194
    %568 = vmatprep.subr.mxu0 %v192
    %569 = vmatpush1.msra.mxu0 %v191
    %570 = vmatprep.subr.mxu0 %v189
    %571 = vmatpush1.msra.mxu0 %v188
    %572 = vmatprep.subr.mxu0 %v186
    %573 = vmatpush1.msra.mxu0 %v185
    %574 = vmatprep.subr.mxu0 %v183
    %575 = vmatpush1.msra.mxu0 %v182
    %576 = vmatprep.subr.mxu0 %v180
    %577 = vmatpush1.msra.mxu0 %v179
    %578 = vmatprep.subr.mxu0 %v177
    %579 = vmatpush1.msra.mxu0 %v176
    %580 = vmatprep.subr.mxu0 %v174
    %581 = vmatpush1.msra.mxu0 %v173
    %582 = vmatprep.subr.mxu0 %v171
    %583 = vmatpush1.msra.mxu0 %v170
    %584 = vmatprep.subr.mxu0 %v168
    %585 = vmatpush1.msra.mxu0 %v167
    %586 = vmatprep.subr.mxu0 %v165
    %587 = vmatpush1.msra.mxu0 %v164
    %588 = vmatprep.subr.mxu0 %v162
    %589 = vmatpush1.msra.mxu0 %v161
    %590 = vmatprep.subr.mxu0 %v159
    %591 = vmatpush1.msra.mxu0 %v158
    %592 = vmatprep.subr.mxu0 %v156
    %593 = vmatpush1.msra.mxu0 %v155
    %594 = vmatprep.subr.mxu0 %v153
    %595 = vmatpush1.msra.mxu0 %v152
    %596 = vmatprep.subr.mxu0 %v150
    %597 = vmatpush1.msra.mxu0 %v149
    %598 = vmatprep.subr.mxu0 %v243
    %599 = vmatpush2.msra.mxu0 %v242
    %600 = vmatprep.subr.mxu0 %v240
    %601 = vmatpush2.msra.mxu0 %v239
    %602 = vmatprep.subr.mxu0 %v237
    %603 = vmatpush2.msra.mxu0 %v236
    %604 = vmatprep.subr.mxu0 %v234
    %605 = vmatpush2.msra.mxu0 %v233
    %606 = vmatprep.subr.mxu0 %v231
    %607 = vmatpush2.msra.mxu0 %v230
    %608 = vmatprep.subr.mxu0 %v228
    %609 = vmatpush2.msra.mxu0 %v227
    %610 = vmatprep.subr.mxu0 %v225
    %611 = vmatpush2.msra.mxu0 %v224
    %612 = vmatprep.subr.mxu0 %v222
    %613 = vmatpush2.msra.mxu0 %v221
    %614 = vmatprep.subr.mxu0 %v219
    %615 = vmatpush2.msra.mxu0 %v218
    %616 = vmatprep.subr.mxu0 %v216
    %617 = vmatpush2.msra.mxu0 %v215
    %618 = vmatprep.subr.mxu0 %v213
    %619 = vmatpush2.msra.mxu0 %v212
    %620 = vmatprep.subr.mxu0 %v210
    %621 = vmatpush2.msra.mxu0 %v209
    %622 = vmatprep.subr.mxu0 %v207
    %623 = vmatpush2.msra.mxu0 %v206
    %624 = vmatprep.subr.mxu0 %v204
    %625 = vmatpush2.msra.mxu0 %v203
    %626 = vmatprep.subr.mxu0 %v201
    %627 = vmatpush2.msra.mxu0 %v200
    %628 = vmatprep.subr.mxu0 %v198
    %629 = vmatpush2.msra.mxu0 %v197
    %630 = vmatprep.mubr.f32.mxu0 %v454
    %631 = vmatmul.mubr.f32.gmra.mxu0 %v450
    %v632 = vpop.f32.mrf.mxu0
    %v633 = vadd.f32 %v562, %v632
    %v634 = vpop.f32.mrf.mxu0
    %v635 = vadd.f32 %v564, %v634
    %636 = vdwg.mxu0
    %637 = vmatprep.subr.mxu0 %v291
    %638 = vmatpush1.msra.mxu0 %v290
    %639 = vmatprep.subr.mxu0 %v288
    %640 = vmatpush1.msra.mxu0 %v287
    %641 = vmatprep.subr.mxu0 %v285
    %642 = vmatpush1.msra.mxu0 %v284
    %643 = vmatprep.subr.mxu0 %v282
    %644 = vmatpush1.msra.mxu0 %v281
    %645 = vmatprep.subr.mxu0 %v279
    %646 = vmatpush1.msra.mxu0 %v278
    %647 = vmatprep.subr.mxu0 %v276
    %648 = vmatpush1.msra.mxu0 %v275
    %649 = vmatprep.subr.mxu0 %v273
    %650 = vmatpush1.msra.mxu0 %v272
    %651 = vmatprep.subr.mxu0 %v270
    %652 = vmatpush1.msra.mxu0 %v269
    %653 = vmatprep.subr.mxu0 %v267
    %654 = vmatpush1.msra.mxu0 %v266
    %655 = vmatprep.subr.mxu0 %v264
    %656 = vmatpush1.msra.mxu0 %v263
    %657 = vmatprep.subr.mxu0 %v261
    %658 = vmatpush1.msra.mxu0 %v260
    %659 = vmatprep.subr.mxu0 %v258
    %660 = vmatpush1.msra.mxu0 %v257
    %661 = vmatprep.subr.mxu0 %v255
    %662 = vmatpush1.msra.mxu0 %v254
    %663 = vmatprep.subr.mxu0 %v252
    %664 = vmatpush1.msra.mxu0 %v251
    %665 = vmatprep.subr.mxu0 %v249
    %666 = vmatpush1.msra.mxu0 %v248
    %667 = vmatprep.subr.mxu0 %v246
    %668 = vmatpush1.msra.mxu0 %v245
    %669 = vmatprep.subr.mxu0 %v339
    %670 = vmatpush2.msra.mxu0 %v338
    %671 = vmatprep.subr.mxu0 %v336
    %672 = vmatpush2.msra.mxu0 %v335
    %673 = vmatprep.subr.mxu0 %v333
    %674 = vmatpush2.msra.mxu0 %v332
    %675 = vmatprep.subr.mxu0 %v330
    %676 = vmatpush2.msra.mxu0 %v329
    %677 = vmatprep.subr.mxu0 %v327
    %678 = vmatpush2.msra.mxu0 %v326
    %679 = vmatprep.subr.mxu0 %v324
    %680 = vmatpush2.msra.mxu0 %v323
    %681 = vmatprep.subr.mxu0 %v321
    %682 = vmatpush2.msra.mxu0 %v320
    %683 = vmatprep.subr.mxu0 %v318
    %684 = vmatpush2.msra.mxu0 %v317
    %685 = vmatprep.subr.mxu0 %v315
    %686 = vmatpush2.msra.mxu0 %v314
    %687 = vmatprep.subr.mxu0 %v312
    %688 = vmatpush2.msra.mxu0 %v311
    %689 = vmatprep.subr.mxu0 %v309
    %690 = vmatpush2.msra.mxu0 %v308
    %691 = vmatprep.subr.mxu0 %v306
    %692 = vmatpush2.msra.mxu0 %v305
    %693 = vmatprep.subr.mxu0 %v303
    %694 = vmatpush2.msra.mxu0 %v302
    %695 = vmatprep.subr.mxu0 %v300
    %696 = vmatpush2.msra.mxu0 %v299
    %697 = vmatprep.subr.mxu0 %v297
    %698 = vmatpush2.msra.mxu0 %v296
    %699 = vmatprep.subr.mxu0 %v294
    %700 = vmatpush2.msra.mxu0 %v293
    %701 = vmatprep.mubr.f32.mxu0 %v462
    %702 = vmatmul.mubr.f32.gmra.mxu0 %v458
    %v703 = vpop.f32.mrf.mxu0
    %v704 = vadd.f32 %v633, %v703
    %v705 = vpop.f32.mrf.mxu0
    %v706 = vadd.f32 %v635, %v705
    %707 = vdwg.mxu0
    %708 = vmatprep.subr.mxu0 %v387
    %709 = vmatpush1.msra.mxu0 %v386
    %710 = vmatprep.subr.mxu0 %v384
    %711 = vmatpush1.msra.mxu0 %v383
    %712 = vmatprep.subr.mxu0 %v381
    %713 = vmatpush1.msra.mxu0 %v380
    %714 = vmatprep.subr.mxu0 %v378
    %715 = vmatpush1.msra.mxu0 %v377
    %716 = vmatprep.subr.mxu0 %v375
    %717 = vmatpush1.msra.mxu0 %v374
    %718 = vmatprep.subr.mxu0 %v372
    %719 = vmatpush1.msra.mxu0 %v371
    %720 = vmatprep.subr.mxu0 %v369
    %721 = vmatpush1.msra.mxu0 %v368
    %722 = vmatprep.subr.mxu0 %v366
    %723 = vmatpush1.msra.mxu0 %v365
    %724 = vmatprep.subr.mxu0 %v363
    %725 = vmatpush1.msra.mxu0 %v362
    %726 = vmatprep.subr.mxu0 %v360
    %727 = vmatpush1.msra.mxu0 %v359
    %728 = vmatprep.subr.mxu0 %v357
    %729 = vmatpush1.msra.mxu0 %v356
    %730 = vmatprep.subr.mxu0 %v354
    %731 = vmatpush1.msra.mxu0 %v353
    %732 = vmatprep.subr.mxu0 %v351
    %733 = vmatpush1.msra.mxu0 %v350
    %734 = vmatprep.subr.mxu0 %v348
    %735 = vmatpush1.msra.mxu0 %v347
    %736 = vmatprep.subr.mxu0 %v345
    %737 = vmatpush1.msra.mxu0 %v344
    %738 = vmatprep.subr.mxu0 %v342
    %739 = vmatpush1.msra.mxu0 %v341
    %740 = vmatprep.subr.mxu0 %v435
    %741 = vmatpush2.msra.mxu0 %v434
    %742 = vmatprep.subr.mxu0 %v432
    %743 = vmatpush2.msra.mxu0 %v431
    %744 = vmatprep.subr.mxu0 %v429
    %745 = vmatpush2.msra.mxu0 %v428
    %746 = vmatprep.subr.mxu0 %v426
    %747 = vmatpush2.msra.mxu0 %v425
    %748 = vmatprep.subr.mxu0 %v423
    %749 = vmatpush2.msra.mxu0 %v422
    %750 = vmatprep.subr.mxu0 %v420
    %751 = vmatpush2.msra.mxu0 %v419
    %752 = vmatprep.subr.mxu0 %v417
    %753 = vmatpush2.msra.mxu0 %v416
    %754 = vmatprep.subr.mxu0 %v414
    %755 = vmatpush2.msra.mxu0 %v413
    %756 = vmatprep.subr.mxu0 %v411
    %757 = vmatpush2.msra.mxu0 %v410
    %758 = vmatprep.subr.mxu0 %v408
    %759 = vmatpush2.msra.mxu0 %v407
    %760 = vmatprep.subr.mxu0 %v405
    %761 = vmatpush2.msra.mxu0 %v404
    %762 = vmatprep.subr.mxu0 %v402
    %763 = vmatpush2.msra.mxu0 %v401
    %764 = vmatprep.subr.mxu0 %v399
    %765 = vmatpush2.msra.mxu0 %v398
    %766 = vmatprep.subr.mxu0 %v396
    %767 = vmatpush2.msra.mxu0 %v395
    %768 = vmatprep.subr.mxu0 %v393
    %769 = vmatpush2.msra.mxu0 %v392
    %770 = vmatprep.subr.mxu0 %v390
    %771 = vmatpush2.msra.mxu0 %v389
    %772 = vmatprep.mubr.f32.mxu0 %v470
    %773 = vmatmul.mubr.f32.gmra.mxu0 %v466
    %v774 = vpop.f32.mrf.mxu0
    %v775 = vadd.f32 %v704, %v774
    %v776 = vpop.f32.mrf.mxu0
    %v777 = vadd.f32 %v706, %v776
    %778 = vdwg.mxu0
    %779 = vmatprep.subr.mxu0 0.0
    %780 = vmatpush1.msra.mxu0 %v100
    %781 = vmatprep.subr.mxu0 0.0
    %782 = vmatpush1.msra.mxu0 %v97
    %783 = vmatprep.subr.mxu0 0.0
    %784 = vmatpush1.msra.mxu0 %v94
    %785 = vmatprep.subr.mxu0 0.0
    %786 = vmatpush1.msra.mxu0 %v91
    %787 = vmatprep.subr.mxu0 0.0
    %788 = vmatpush1.msra.mxu0 %v88
    %789 = vmatprep.subr.mxu0 0.0
    %790 = vmatpush1.msra.mxu0 %v85
    %791 = vmatprep.subr.mxu0 0.0
    %792 = vmatpush1.msra.mxu0 %v82
    %793 = vmatprep.subr.mxu0 0.0
    %794 = vmatpush1.msra.mxu0 %v79
    %795 = vmatprep.subr.mxu0 0.0
    %796 = vmatpush1.msra.mxu0 %v76
    %797 = vmatprep.subr.mxu0 0.0
    %798 = vmatpush1.msra.mxu0 %v73
    %799 = vmatprep.subr.mxu0 0.0
    %800 = vmatpush1.msra.mxu0 %v70
    %801 = vmatprep.subr.mxu0 0.0
    %802 = vmatpush1.msra.mxu0 %v67
    %803 = vmatprep.subr.mxu0 0.0
    %804 = vmatpush1.msra.mxu0 %v64
    %805 = vmatprep.subr.mxu0 0.0
    %806 = vmatpush1.msra.mxu0 %v61
    %807 = vmatprep.subr.mxu0 0.0
    %808 = vmatpush1.msra.mxu0 %v58
    %809 = vmatprep.subr.mxu0 0.0
    %810 = vmatpush1.msra.mxu0 %v55
    %811 = vmatprep.subr.mxu0 0.0
    %812 = vmatpush2.msra.mxu0 %v148
    %813 = vmatprep.subr.mxu0 0.0
    %814 = vmatpush2.msra.mxu0 %v145
    %815 = vmatprep.subr.mxu0 0.0
    %816 = vmatpush2.msra.mxu0 %v142
    %817 = vmatprep.subr.mxu0 0.0
    %818 = vmatpush2.msra.mxu0 %v139
    %819 = vmatprep.subr.mxu0 0.0
    %820 = vmatpush2.msra.mxu0 %v136
    %821 = vmatprep.subr.mxu0 0.0
    %822 = vmatpush2.msra.mxu0 %v133
    %823 = vmatprep.subr.mxu0 0.0
    %824 = vmatpush2.msra.mxu0 %v130
    %825 = vmatprep.subr.mxu0 0.0
    %826 = vmatpush2.msra.mxu0 %v127
    %827 = vmatprep.subr.mxu0 0.0
    %828 = vmatpush2.msra.mxu0 %v124
    %829 = vmatprep.subr.mxu0 0.0
    %830 = vmatpush2.msra.mxu0 %v121
    %831 = vmatprep.subr.mxu0 0.0
    %832 = vmatpush2.msra.mxu0 %v118
    %833 = vmatprep.subr.mxu0 0.0
    %834 = vmatpush2.msra.mxu0 %v115
    %835 = vmatprep.subr.mxu0 0.0
    %836 = vmatpush2.msra.mxu0 %v112
    %837 = vmatprep.subr.mxu0 0.0
    %838 = vmatpush2.msra.mxu0 %v109
    %839 = vmatprep.subr.mxu0 0.0
    %840 = vmatpush2.msra.mxu0 %v106
    %841 = vmatprep.subr.mxu0 0.0
    %842 = vmatpush2.msra.mxu0 %v103
    %843 = vmatprep.mubr.f32.mxu0 %v446
    %844 = vmatmul.mubr.f32.gmra.mxu0 %v442
    %v845 = vpop.f32.mrf.mxu0
    %v846 = vadd.f32 %v491, %v845
    %v847 = vpop.f32.mrf.mxu0
    %848 = vdwg.mxu0
    %849 = vmatprep.subr.mxu0 0.0
    %850 = vmatpush1.msra.mxu0 %v196
    %851 = vmatprep.subr.mxu0 0.0
    %852 = vmatpush1.msra.mxu0 %v193
    %853 = vmatprep.subr.mxu0 0.0
    %854 = vmatpush1.msra.mxu0 %v190
    %855 = vmatprep.subr.mxu0 0.0
    %856 = vmatpush1.msra.mxu0 %v187
    %857 = vmatprep.subr.mxu0 0.0
    %858 = vmatpush1.msra.mxu0 %v184
    %859 = vmatprep.subr.mxu0 0.0
    %860 = vmatpush1.msra.mxu0 %v181
    %861 = vmatprep.subr.mxu0 0.0
    %862 = vmatpush1.msra.mxu0 %v178
    %863 = vmatprep.subr.mxu0 0.0
    %864 = vmatpush1.msra.mxu0 %v175
    %865 = vmatprep.subr.mxu0 0.0
    %866 = vmatpush1.msra.mxu0 %v172
    %867 = vmatprep.subr.mxu0 0.0
    %868 = vmatpush1.msra.mxu0 %v169
    %869 = vmatprep.subr.mxu0 0.0
    %870 = vmatpush1.msra.mxu0 %v166
    %871 = vmatprep.subr.mxu0 0.0
    %872 = vmatpush1.msra.mxu0 %v163
    %873 = vmatprep.subr.mxu0 0.0
    %874 = vmatpush1.msra.mxu0 %v160
    %875 = vmatprep.subr.mxu0 0.0
    %876 = vmatpush1.msra.mxu0 %v157
    %877 = vmatprep.subr.mxu0 0.0
    %878 = vmatpush1.msra.mxu0 %v154
    %879 = vmatprep.subr.mxu0 0.0
    %880 = vmatpush1.msra.mxu0 %v151
    %881 = vmatprep.subr.mxu0 0.0
    %882 = vmatpush2.msra.mxu0 %v244
    %883 = vmatprep.subr.mxu0 0.0
    %884 = vmatpush2.msra.mxu0 %v241
    %885 = vmatprep.subr.mxu0 0.0
    %886 = vmatpush2.msra.mxu0 %v238
    %887 = vmatprep.subr.mxu0 0.0
    %888 = vmatpush2.msra.mxu0 %v235
    %889 = vmatprep.subr.mxu0 0.0
    %890 = vmatpush2.msra.mxu0 %v232
    %891 = vmatprep.subr.mxu0 0.0
    %892 = vmatpush2.msra.mxu0 %v229
    %893 = vmatprep.subr.mxu0 0.0
    %894 = vmatpush2.msra.mxu0 %v226
    %895 = vmatprep.subr.mxu0 0.0
    %896 = vmatpush2.msra.mxu0 %v223
    %897 = vmatprep.subr.mxu0 0.0
    %898 = vmatpush2.msra.mxu0 %v220
    %899 = vmatprep.subr.mxu0 0.0
    %900 = vmatpush2.msra.mxu0 %v217
    %901 = vmatprep.subr.mxu0 0.0
    %902 = vmatpush2.msra.mxu0 %v214
    %903 = vmatprep.subr.mxu0 0.0
    %904 = vmatpush2.msra.mxu0 %v211
    %905 = vmatprep.subr.mxu0 0.0
    %906 = vmatpush2.msra.mxu0 %v208
    %907 = vmatprep.subr.mxu0 0.0
    %908 = vmatpush2.msra.mxu0 %v205
    %909 = vmatprep.subr.mxu0 0.0
    %910 = vmatpush2.msra.mxu0 %v202
    %911 = vmatprep.subr.mxu0 0.0
    %912 = vmatpush2.msra.mxu0 %v199
    %913 = vmatprep.mubr.f32.mxu0 %v454
    %914 = vmatmul.mubr.f32.gmra.mxu0 %v450
    %v915 = vpop.f32.mrf.mxu0
    %v916 = vadd.f32 %v846, %v915
    %v917 = vpop.f32.mrf.mxu0
    %918 = vdwg.mxu0
    %919 = vmatprep.subr.mxu0 0.0
    %920 = vmatpush1.msra.mxu0 %v292
    %921 = vmatprep.subr.mxu0 0.0
    %922 = vmatpush1.msra.mxu0 %v289
    %923 = vmatprep.subr.mxu0 0.0
    %924 = vmatpush1.msra.mxu0 %v286
    %925 = vmatprep.subr.mxu0 0.0
    %926 = vmatpush1.msra.mxu0 %v283
    %927 = vmatprep.subr.mxu0 0.0
    %928 = vmatpush1.msra.mxu0 %v280
    %929 = vmatprep.subr.mxu0 0.0
    %930 = vmatpush1.msra.mxu0 %v277
    %931 = vmatprep.subr.mxu0 0.0
    %932 = vmatpush1.msra.mxu0 %v274
    %933 = vmatprep.subr.mxu0 0.0
    %934 = vmatpush1.msra.mxu0 %v271
    %935 = vmatprep.subr.mxu0 0.0
    %936 = vmatpush1.msra.mxu0 %v268
    %937 = vmatprep.subr.mxu0 0.0
    %938 = vmatpush1.msra.mxu0 %v265
    %939 = vmatprep.subr.mxu0 0.0
    %940 = vmatpush1.msra.mxu0 %v262
    %941 = vmatprep.subr.mxu0 0.0
    %942 = vmatpush1.msra.mxu0 %v259
    %943 = vmatprep.subr.mxu0 0.0
    %944 = vmatpush1.msra.mxu0 %v256
    %945 = vmatprep.subr.mxu0 0.0
    %946 = vmatpush1.msra.mxu0 %v253
    %947 = vmatprep.subr.mxu0 0.0
    %948 = vmatpush1.msra.mxu0 %v250
    %949 = vmatprep.subr.mxu0 0.0
    %950 = vmatpush1.msra.mxu0 %v247
    %951 = vmatprep.subr.mxu0 0.0
    %952 = vmatpush2.msra.mxu0 %v340
    %953 = vmatprep.subr.mxu0 0.0
    %954 = vmatpush2.msra.mxu0 %v337
    %955 = vmatprep.subr.mxu0 0.0
    %956 = vmatpush2.msra.mxu0 %v334
    %957 = vmatprep.subr.mxu0 0.0
    %958 = vmatpush2.msra.mxu0 %v331
    %959 = vmatprep.subr.mxu0 0.0
    %960 = vmatpush2.msra.mxu0 %v328
    %961 = vmatprep.subr.mxu0 0.0
    %962 = vmatpush2.msra.mxu0 %v325
    %963 = vmatprep.subr.mxu0 0.0
    %964 = vmatpush2.msra.mxu0 %v322
    %965 = vmatprep.subr.mxu0 0.0
    %966 = vmatpush2.msra.mxu0 %v319
    %967 = vmatprep.subr.mxu0 0.0
    %968 = vmatpush2.msra.mxu0 %v316
    %969 = vmatprep.subr.mxu0 0.0
    %970 = vmatpush2.msra.mxu0 %v313
    %971 = vmatprep.subr.mxu0 0.0
    %972 = vmatpush2.msra.mxu0 %v310
    %973 = vmatprep.subr.mxu0 0.0
    %974 = vmatpush2.msra.mxu0 %v307
    %975 = vmatprep.subr.mxu0 0.0
    %976 = vmatpush2.msra.mxu0 %v304
    %977 = vmatprep.subr.mxu0 0.0
    %978 = vmatpush2.msra.mxu0 %v301
    %979 = vmatprep.subr.mxu0 0.0
    %980 = vmatpush2.msra.mxu0 %v298
    %981 = vmatprep.subr.mxu0 0.0
    %982 = vmatpush2.msra.mxu0 %v295
    %983 = vmatprep.mubr.f32.mxu0 %v462
    %984 = vmatmul.mubr.f32.gmra.mxu0 %v458
    %v985 = vpop.f32.mrf.mxu0
    %v986 = vadd.f32 %v916, %v985
    %v987 = vpop.f32.mrf.mxu0
    %988 = vdwg.mxu0
    %989 = vmatprep.subr.mxu0 0.0
    %990 = vmatpush1.msra.mxu0 %v388
    %991 = vmatprep.subr.mxu0 0.0
    %992 = vmatpush1.msra.mxu0 %v385
    %993 = vmatprep.subr.mxu0 0.0
    %994 = vmatpush1.msra.mxu0 %v382
    %995 = vmatprep.subr.mxu0 0.0
    %996 = vmatpush1.msra.mxu0 %v379
    %997 = vmatprep.subr.mxu0 0.0
    %998 = vmatpush1.msra.mxu0 %v376
    %999 = vmatprep.subr.mxu0 0.0
    %1000 = vmatpush1.msra.mxu0 %v373
    %1001 = vmatprep.subr.mxu0 0.0
    %1002 = vmatpush1.msra.mxu0 %v370
    %1003 = vmatprep.subr.mxu0 0.0
    %1004 = vmatpush1.msra.mxu0 %v367
    %1005 = vmatprep.subr.mxu0 0.0
    %1006 = vmatpush1.msra.mxu0 %v364
    %1007 = vmatprep.subr.mxu0 0.0
    %1008 = vmatpush1.msra.mxu0 %v361
    %1009 = vmatprep.subr.mxu0 0.0
    %1010 = vmatpush1.msra.mxu0 %v358
    %1011 = vmatprep.subr.mxu0 0.0
    %1012 = vmatpush1.msra.mxu0 %v355
    %1013 = vmatprep.subr.mxu0 0.0
    %1014 = vmatpush1.msra.mxu0 %v352
    %1015 = vmatprep.subr.mxu0 0.0
    %1016 = vmatpush1.msra.mxu0 %v349
    %1017 = vmatprep.subr.mxu0 0.0
    %1018 = vmatpush1.msra.mxu0 %v346
    %1019 = vmatprep.subr.mxu0 0.0
    %1020 = vmatpush1.msra.mxu0 %v343
    %1021 = vmatprep.subr.mxu0 0.0
    %1022 = vmatpush2.msra.mxu0 %v436
    %1023 = vmatprep.subr.mxu0 0.0
    %1024 = vmatpush2.msra.mxu0 %v433
    %1025 = vmatprep.subr.mxu0 0.0
    %1026 = vmatpush2.msra.mxu0 %v430
    %1027 = vmatprep.subr.mxu0 0.0
    %1028 = vmatpush2.msra.mxu0 %v427
    %1029 = vmatprep.subr.mxu0 0.0
    %1030 = vmatpush2.msra.mxu0 %v424
    %1031 = vmatprep.subr.mxu0 0.0
    %1032 = vmatpush2.msra.mxu0 %v421
    %1033 = vmatprep.subr.mxu0 0.0
    %1034 = vmatpush2.msra.mxu0 %v418
    %1035 = vmatprep.subr.mxu0 0.0
    %1036 = vmatpush2.msra.mxu0 %v415
    %1037 = vmatprep.subr.mxu0 0.0
    %1038 = vmatpush2.msra.mxu0 %v412
    %1039 = vmatprep.subr.mxu0 0.0
    %1040 = vmatpush2.msra.mxu0 %v409
    %1041 = vmatprep.subr.mxu0 0.0
    %1042 = vmatpush2.msra.mxu0 %v406
    %1043 = vmatprep.subr.mxu0 0.0
    %1044 = vmatpush2.msra.mxu0 %v403
    %1045 = vmatprep.subr.mxu0 0.0
    %1046 = vmatpush2.msra.mxu0 %v400
    %1047 = vmatprep.subr.mxu0 0.0
    %1048 = vmatpush2.msra.mxu0 %v397
    %1049 = vmatprep.subr.mxu0 0.0
    %1050 = vmatpush2.msra.mxu0 %v394
    %1051 = vmatprep.subr.mxu0 0.0
    %1052 = vmatpush2.msra.mxu0 %v391
    %1053 = vmatprep.mubr.f32.mxu0 %v470
    %1054 = vmatmul.mubr.f32.gmra.mxu0 %v466
    %v1055 = vpop.f32.mrf.mxu0
    %v1056 = vadd.f32 %v986, %v1055
    %v1057 = vpop.f32.mrf.mxu0
    %1058 = vdwg.mxu0
    %v1062 = vcombine.low %v775, %v777
    %v1064 = vunpack.c.l.s4 1966171168
    %v1065 = vunpack.c.0.s8 %v1064
    %v1066 = vlaneseq
    %v1067 = vshrl.u32 %v1066, 7
    %v1068 = vsub.s32 %v1065, %v1067
    %v1069 = vrot.slane %v1062, %v1068
    %v1071 = vunpack.c.l.s4 1966171168
    %v1072 = vunpack.c.0.s8 %v1071
    %v1073 = vlaneseq
    %v1074 = vshrl.u32 %v1073, 7
    %v1075 = vsub.s32 %v1072, %v1074
    %v1076 = vrot.slane %v1056, %v1075
    %v1077 = vcombine.low %v1069, %v1076
    %v1079 = vunpack.c.l.s4 1966171168
    %v1080 = vunpack.c.0.s8 %v1079
    %v1081 = vlaneseq
    %v1082 = vshrl.u32 %v1081, 7
    %v1083 = vsub.s32 %v1080, %v1082
    %v1084 = vrot.slane %v1077, %v1083
    %v1086 = vlaneseq
    %vm1087 = vcmp.ge.s32.totalorder %v1086, 0
    %vm1088 = vcmp.lt.s32.totalorder %v1086, 384
    %vm1089 = vmand %vm1087, %vm1088
    %1090 = vst.msk [vmem:[#allocation8] sm:$0x7] %vm1089, %v1084
    // Predicated region
    $region26: #{tpu_custom_call.1} parent=1 // pred_check
      _
    $region27: #{tpu_custom_call.1} parent=1 // pred_check_branch
      %1092 = sbr.rel (0) target = $region29
    $region28: #{tpu_custom_call.1} parent=1 // pred_region
      %s1094 = ssub.s32 48, 48
      %1095 = vsyncadd [#allocation4], %s1094
      %s1097 = sshll.u32 [#allocation8], 4
      %s1098 = int_to_ptr.vmem [resolvable:$true] %s1097
      %1100 = dma.vmem_to_hbm [thread:$0]  %s1098, 48, %s3, [#allocation4]
    $region29: #{tpu_custom_call.1} parent=1 // pred_fallthru
      _
    // Predicated region
    $region30: #{tpu_custom_call.1} parent=1 // pred_check
      _
    $region31: #{tpu_custom_call.1} parent=1 // pred_check_branch
      %1102 = sbr.rel (0) target = $region33
    $region32: #{tpu_custom_call.1} parent=1 // pred_region
      %1103 = dma.done [#allocation4], 48
    $region33: #{tpu_custom_call.1} parent=1 // pred_fallthru
      _
    %1104 = vsyncpa [#allocation3], 1
    %1105 = vsyncpa [#allocation6], 1
    %1106 = vsyncpa [#allocation4], 1

</llo_original>
